<compile_context>
chip_gen: v7x
topology: tpu7x:2x2x1
jax: 0.10.0
libtpu: 0.0.40
codegen_flags: <defaults>
</compile_context>

<pallas_src>
import jax
import jax.numpy as jnp
from jax.experimental import pallas as pl
from jax.experimental.pallas import tpu as pltpu


def _round_up(x, m):
    return ((x + m - 1) // m) * m


def avg_encoder_kernel(x_ref, w_ref, b_ref, f_ref, out_ref, h_ref):
    """One row-tile of the AverageEncoder forward.

    x_ref:   (TMp, 128) streamed packed activations (P = 128//D original rows per packed row)
    w_ref:   (128, 128) resident block-diagonal weight  kron(I_P, W^T)
    b_ref:   (1,   128) resident bias, tiled P times along lanes
    f_ref:   (128, H)   resident lane-fold matrix  tile(I_H, (P, 1)) / S
    out_ref: (TMp, 128) packed projected output (byte-identical to the (.., S, H) rows)
    h_ref:   (G,   H)   per-sequence means; G = TMp // rows_per_seq sequences in this tile
    """
    # Projection (+ bias).  Activation is 'linear' (identity) in the reference module.
    y = jnp.dot(x_ref[...], w_ref[...], preferred_element_type=jnp.float32)
    y = y + b_ref[...].astype(jnp.float32)
    out_ref[...] = y.astype(out_ref.dtype)

    # Per-sequence mean: each sequence occupies `rows_per_seq` consecutive packed
    # rows.  Sum them via sublane-strided reads of the just-written output tile
    # (no relayout, no O(TM^2) averaging matmul), then fold the P lane-blocks of
    # H and apply the 1/S scale with a tiny resident (128, H) MXU matmul.
    g = h_ref.shape[0]
    rows_per_seq = x_ref.shape[0] // g
    if rows_per_seq == 1:
        ysum = y
    else:
        ysum = out_ref[pl.ds(0, g, stride=rows_per_seq), :].astype(jnp.float32)
        for r in range(1, rows_per_seq):
            ysum = ysum + out_ref[pl.ds(r, g, stride=rows_per_seq), :].astype(jnp.float32)
    h_ref[...] = jnp.dot(ysum, f_ref[...],
                         preferred_element_type=jnp.float32).astype(h_ref.dtype)


def average_encoder(seqs, lengths, weight, bias, *, tile_rows_target=1024):
    """AverageEncoder forward.

    seqs:    [B, S, D] (batch, seq, input_size)
    lengths: [B] int — accepted but unused (reference forward does a plain mean over dim 1)
    weight:  [H, D]   (PyTorch nn.Linear layout)
    bias:    [H]
    Returns (h, output): h [B, H], output [B, S, H].
    """
    del lengths  # plain mean over the sequence axis, matching the PyTorch module
    B, S, D = seqs.shape
    H = weight.shape[0]
    dtype = seqs.dtype
    itemsize = seqs.dtype.itemsize

    packable = (D == H) and (128 % D == 0) and (S % (128 // D) == 0)
    if not packable:
        # TODO(synk): packed-lane Pallas path needs D == H, D | 128 and (128//D) | S; other shapes fall back to plain XLA.
        out = (seqs @ weight.T.astype(dtype) + bias.astype(dtype)).astype(dtype)
        return out.mean(axis=1).astype(dtype), out

    P = 128 // D                 # original rows packed per 128-lane row
    rows_per_seq = S // P        # packed rows per sequence
    Mp = B * rows_per_seq        # total packed rows (= B*S*D/128)
    unit = 8 * rows_per_seq      # keeps the x/out tile and the h block sublane(8)-aligned
    cap = max(unit, (tile_rows_target // unit) * unit)

    # Packed view of the activations: free contiguous reshape — no jnp.pad pass.
    x_p = seqs.reshape(Mp, 128)
    pad_rows = 0
    if Mp % unit == 0 and Mp // unit >= 2:
        # Multi-tile path: largest multiple of `unit` dividing Mp, <= cap, and leaving
        # >= 2 grid steps so both v7x TensorCores get sharded work.
        tile_rows = unit
        for k in range(cap // unit, 0, -1):
            cand = k * unit
            if Mp % cand == 0 and Mp // cand >= 2:
                tile_rows = cand
                break
    elif Mp <= cap:
        # Small problem (demo shapes): one full-extent tile; full-dim blocks are legal.
        tile_rows = Mp
    else:
        # Rare slow path (awkward Mp): pad whole fake sequences up to a tile multiple.
        tile_rows = cap
        pad_rows = _round_up(Mp, tile_rows) - Mp
        x_p = jnp.pad(x_p, ((0, pad_rows), (0, 0)))

    m_tot = Mp + pad_rows
    n_tiles = m_tot // tile_rows
    g = tile_rows // rows_per_seq     # sequences per grid step
    b_tot = m_tot // rows_per_seq     # total (possibly padded) sequences

    # Resident operands: constant index_map -> DMA'd once, stay in VMEM across steps.
    wt = weight.T.astype(dtype)                                           # (D, H)
    w_bd = jnp.kron(jnp.eye(P, dtype=dtype), wt)                          # (128, 128)
    b_t = jnp.tile(bias.astype(dtype).reshape(1, H), (1, P))              # (1, 128)
    fold = jnp.tile(jnp.eye(H, dtype=jnp.float32), (P, 1)) / float(S)     # (128, H)

    out_shapes = (
        jax.ShapeDtypeStruct((m_tot, 128), dtype),       # packed projected output
        jax.ShapeDtypeStruct((b_tot, H), jnp.float32),   # per-sequence means
    )

    grid_spec = pltpu.PrefetchScalarGridSpec(
        num_scalar_prefetch=0,
        grid=(n_tiles,),
        in_specs=[
            pl.BlockSpec((tile_rows, 128), lambda i: (i, 0)),   # streamed packed activations
            pl.BlockSpec((128, 128), lambda i: (0, 0)),         # resident block-diag weight
            pl.BlockSpec((1, 128), lambda i: (0, 0)),           # resident tiled bias
            pl.BlockSpec((128, H), lambda i: (0, 0)),           # resident lane-fold matrix
        ],
        out_specs=[
            pl.BlockSpec((tile_rows, 128), lambda i: (i, 0)),
            pl.BlockSpec((g, H), lambda i: (i, 0)),
        ],
    )

    # Explicit VMEM budget: resident + double-buffered streamed tiles, 4x headroom;
    # capped well below v7x's 64 MiB physical VMEM.
    resident_bytes = (128 * 128 + 128) * itemsize + 128 * H * 4
    stream_bytes = 2 * tile_rows * 128 * itemsize + g * H * 4
    vmem_limit = int(min(max(4 * (resident_bytes + 2 * stream_bytes), 16 << 20), 32 << 20))

    out_p, h = pl.pallas_call(
        avg_encoder_kernel,
        out_shape=out_shapes,
        grid_spec=grid_spec,
        compiler_params=pltpu.CompilerParams(
            dimension_semantics=("parallel",),
            vmem_limit_bytes=vmem_limit,
        ),
    )(x_p, w_bd, b_t, fold)

    if pad_rows:
        out_p = out_p[:Mp]
        h = h[:B]
    output = out_p.reshape(B, S, H)   # free: packed rows are byte-identical to (B, S, H)
    return h.astype(dtype), output


if __name__ == "__main__":
    key = jax.random.PRNGKey(0)
    k_seq, k_w, k_b = jax.random.split(key, 3)

    B, S, D_in, H = 2, 8, 32, 32   # batch, seq, input_size, hidden_size

    seqs = jax.random.normal(k_seq, (B, S, D_in), dtype=jnp.float32)
    lengths = jnp.full((B,), S, dtype=jnp.int32)   # unused by the forward (plain mean)

    # Deterministic synthetic parameters (nn.Linear(input_size, hidden_size) shapes)
    weight = jax.random.normal(k_w, (H, D_in), dtype=jnp.float32) * 0.1
    bias = jax.random.normal(k_b, (H,), dtype=jnp.float32) * 0.1

    h, output = average_encoder(seqs, lengths, weight, bias)
    h = jax.block_until_ready(h)
    output = jax.block_until_ready(output)

    # Reference check in plain JAX (identity activation).
    ref_out = seqs @ weight.T + bias
    ref_h = ref_out.mean(axis=1)
    assert output.shape == (B, S, H) and h.shape == (B, H)
    assert jnp.allclose(output, ref_out, atol=1e-5, rtol=1e-5)
    assert jnp.allclose(h, ref_h, atol=1e-5, rtol=1e-5)

    print("KERNEL_OK")
</pallas_src>

<mosaic_0001>
module attributes {stable_mosaic.version = 11 : i64} {
  func.func @avg_encoder_kernel(%arg0: i32, %arg1: memref<4x128xf32, #tpu.memory_space<vmem>>, %arg2: memref<128x128xf32, #tpu.memory_space<vmem>>, %arg3: memref<1x128xf32, #tpu.memory_space<vmem>>, %arg4: memref<128x32xf32, #tpu.memory_space<vmem>>, %arg5: memref<4x128xf32, #tpu.memory_space<vmem>>, %arg6: memref<2x32xf32, #tpu.memory_space<vmem>>) attributes {dimension_semantics = [#tpu.dimension_semantics<parallel>], iteration_bounds = array<i64: 1>, scalar_prefetch = 0 : i64, scratch_operands = 0 : i64, tpu.core_type = #tpu.core_type<tc>, window_params = [{transform_indices = @transform_0, window_bounds = array<i64: 4, 128>}, {pipeline_mode = #tpu.pipeline_mode<synchronous>, transform_indices = @transform_1, window_bounds = array<i64: 128, 128>}, {pipeline_mode = #tpu.pipeline_mode<synchronous>, transform_indices = @transform_2, window_bounds = array<i64: 1, 128>}, {pipeline_mode = #tpu.pipeline_mode<synchronous>, transform_indices = @transform_3, window_bounds = array<i64: 128, 32>}, {transform_indices = @transform_4, window_bounds = array<i64: 4, 128>}, {transform_indices = @transform_5, window_bounds = array<i64: 2, 32>}]} {
    %c0 = arith.constant 0 : index
    %c0_0 = arith.constant 0 : index
    %0 = vector.load %arg1[%c0, %c0_0] : memref<4x128xf32, #tpu.memory_space<vmem>>, vector<4x128xf32>
    %c0_1 = arith.constant 0 : index
    %c0_2 = arith.constant 0 : index
    %1 = vector.load %arg2[%c0_1, %c0_2] : memref<128x128xf32, #tpu.memory_space<vmem>>, vector<128x128xf32>
    %cst = arith.constant dense<0.000000e+00> : vector<4x128xf32>
    %2 = tpu.matmul %0, %1, %cst {dimension_numbers = #tpu.dot_dimension_numbers<[1], [0], [0], [1], [0, 0, 1, 1], [], []>} : vector<4x128xf32>, vector<128x128xf32>, vector<4x128xf32> -> vector<4x128xf32>
    %c0_3 = arith.constant 0 : index
    %c0_4 = arith.constant 0 : index
    %3 = vector.load %arg3[%c0_3, %c0_4] : memref<1x128xf32, #tpu.memory_space<vmem>>, vector<1x128xf32>
    %4 = vector.broadcast %3 : vector<1x128xf32> to vector<4x128xf32>
    %5 = arith.addf %2, %4 : vector<4x128xf32>
    %c0_5 = arith.constant 0 : index
    %c0_6 = arith.constant 0 : index
    %6 = vector.load %arg5[%c0_5, %c0_6] : memref<4x128xf32, #tpu.memory_space<vmem>>, vector<4x128xf32>
    tpu.vector_store %arg5[%c0_5, %c0_6], %5 {strides = array<i32>} : memref<4x128xf32, #tpu.memory_space<vmem>>, vector<4x128xf32>,
    %c0_7 = arith.constant 0 : index
    %c0_8 = arith.constant 0 : index
    %7 = tpu.strided_load %arg5[%c0_7, %c0_8] {strides = array<i32: 2, 1>} : memref<4x128xf32, #tpu.memory_space<vmem>>, vector<2x128xf32>
    %c1 = arith.constant 1 : index
    %c0_9 = arith.constant 0 : index
    %8 = tpu.strided_load %arg5[%c1, %c0_9] {strides = array<i32: 2, 1>} : memref<4x128xf32, #tpu.memory_space<vmem>>, vector<2x128xf32>
    %9 = arith.addf %7, %8 : vector<2x128xf32>
    %c0_10 = arith.constant 0 : index
    %c0_11 = arith.constant 0 : index
    %10 = vector.load %arg4[%c0_10, %c0_11] : memref<128x32xf32, #tpu.memory_space<vmem>>, vector<128x32xf32>
    %cst_12 = arith.constant dense<0.000000e+00> : vector<2x32xf32>
    %11 = tpu.matmul %9, %10, %cst_12 {dimension_numbers = #tpu.dot_dimension_numbers<[1], [0], [0], [1], [0, 0, 1, 1], [], []>} : vector<2x128xf32>, vector<128x32xf32>, vector<2x32xf32> -> vector<2x32xf32>
    %c0_13 = arith.constant 0 : index
    %c0_14 = arith.constant 0 : index
    %12 = vector.load %arg6[%c0_13, %c0_14] : memref<2x32xf32, #tpu.memory_space<vmem>>, vector<2x32xf32>
    tpu.vector_store %arg6[%c0_13, %c0_14], %11 {strides = array<i32>} : memref<2x32xf32, #tpu.memory_space<vmem>>, vector<2x32xf32>,
    return
  }
  func.func @transform_0(%arg0: i32) -> (i32, i32) {
    %c0_i32 = arith.constant 0 : i32
    %c0_i32_0 = arith.constant 0 : i32
    return %arg0, %c0_i32 : i32, i32
  }
  func.func @transform_1(%arg0: i32) -> (i32, i32) {
    %c0_i32 = arith.constant 0 : i32
    %c0_i32_0 = arith.constant 0 : i32
    %c0_i32_1 = arith.constant 0 : i32
    return %c0_i32, %c0_i32_0 : i32, i32
  }
  func.func @transform_2(%arg0: i32) -> (i32, i32) {
    %c0_i32 = arith.constant 0 : i32
    %c0_i32_0 = arith.constant 0 : i32
    %c0_i32_1 = arith.constant 0 : i32
    return %c0_i32, %c0_i32_0 : i32, i32
  }
  func.func @transform_3(%arg0: i32) -> (i32, i32) {
    %c0_i32 = arith.constant 0 : i32
    %c0_i32_0 = arith.constant 0 : i32
    %c0_i32_1 = arith.constant 0 : i32
    return %c0_i32, %c0_i32_0 : i32, i32
  }
  func.func @transform_4(%arg0: i32) -> (i32, i32) {
    %c0_i32 = arith.constant 0 : i32
    %c0_i32_0 = arith.constant 0 : i32
    return %arg0, %c0_i32 : i32, i32
  }
  func.func @transform_5(%arg0: i32) -> (i32, i32) {
    %c0_i32 = arith.constant 0 : i32
    %c0_i32_0 = arith.constant 0 : i32
    return %arg0, %c0_i32 : i32, i32
  }
}

</mosaic_0001>

<llo_original>
// kernel: tpu_custom_call.1
$region0: #{tpu_custom_call.1}
  #allocation0 [shape = 'u32[]', space=smem, size = 0x4, offset = 0x4, fixed_abs, tag = 'smem constant byte address 0x4 - core index']
  #allocation1 [shape = 'u32[144,128]{1,0:T(1,128)}', space=vmem, size = 0x12000, scoped, tag = 'internal scratch']
  %s0 = inlined_call_operand.vmem [shape: f32[4,128], index: 0, kind: input, shape index: {}]
  %s1 = inlined_call_operand.vmem [shape: f32[128,128], index: 1, kind: input, shape index: {}]
  %s2 = inlined_call_operand.vmem [shape: f32[1,128], index: 2, kind: input, shape index: {}]
  %s3 = inlined_call_operand.vmem [shape: f32[128,32], index: 3, kind: input, shape index: {}]
  %s4 = inlined_call_operand.hbm [shape: f32[4,128], index: 4, kind: output, shape index: {0}]
  %s5 = inlined_call_operand.hbm [shape: f32[2,32], index: 5, kind: output, shape index: {1}]
  %6 = xla_tuple %s4, %s5
  %s7 = sld [smem:[#allocation0]]
  $region34: #{tpu_custom_call.1} parent=0
    _
  %s9 = ssub.s32 1, %s7
  %s10 = scalar_select 0, %s9, %s7
  $region1: #{tpu_custom_call.1} parent=0
    #allocation2 [shape = 'u8[2048]{0}', space=vmem, size = 0x800, scoped, tag = 'output window, operand 0, single buffered']
    #allocation3 [shape = 's32[1]{0}', space=sflag, size = 0x4, scoped, tag = 'scoped memory for tpu_custom_call.1']
    #allocation4 [shape = 'u8[1024]{0}', space=vmem, size = 0x400, scoped, tag = 'output window, operand 1, single buffered']
    #allocation5 [shape = 's32[1]{0}', space=sflag, size = 0x4, scoped, tag = 'scoped memory for tpu_custom_call.1']
    %11 = vsyncpa [#allocation3], 0
    %12 = vsyncpa [#allocation5], 0
    // Predicated region
    $region2: #{tpu_custom_call.1} parent=1 // pred_check
      _
    $region3: #{tpu_custom_call.1} parent=1 // pred_check_branch
      %14 = sbr.rel (0) target = $region5
    $region4: #{tpu_custom_call.1} parent=1 // pred_region
      _
    $region5: #{tpu_custom_call.1} parent=1 // pred_fallthru
      _
    // Predicated region
    $region6: #{tpu_custom_call.1} parent=1 // pred_check
      _
    $region7: #{tpu_custom_call.1} parent=1 // pred_check_branch
      %16 = sbr.rel (0) target = $region9
    $region8: #{tpu_custom_call.1} parent=1 // pred_region
      _
    $region9: #{tpu_custom_call.1} parent=1 // pred_fallthru
      _
    // Predicated region
    $region10: #{tpu_custom_call.1} parent=1 // pred_check
      _
    $region11: #{tpu_custom_call.1} parent=1 // pred_check_branch
      %18 = sbr.rel (0) target = $region13
    $region12: #{tpu_custom_call.1} parent=1 // pred_region
      _
    $region13: #{tpu_custom_call.1} parent=1 // pred_fallthru
      _
    // Predicated region
    $region14: #{tpu_custom_call.1} parent=1 // pred_check
      _
    $region15: #{tpu_custom_call.1} parent=1 // pred_check_branch
      %20 = sbr.rel (0) target = $region17
    $region16: #{tpu_custom_call.1} parent=1 // pred_region
      _
    $region17: #{tpu_custom_call.1} parent=1 // pred_fallthru
      _
    %v21 = vld [vmem:[%s0] sm:$0xf]
    %v22 = vld [vmem:[%s1] sm:$0xff]
    %v23 = vld [vmem:[%s1 + $0x8] sm:$0xff]
    %v24 = vld [vmem:[%s1 + $0x10] sm:$0xff]
    %v25 = vld [vmem:[%s1 + $0x18] sm:$0xff]
    %v26 = vld [vmem:[%s1 + $0x20] sm:$0xff]
    %v27 = vld [vmem:[%s1 + $0x28] sm:$0xff]
    %v28 = vld [vmem:[%s1 + $0x30] sm:$0xff]
    %v29 = vld [vmem:[%s1 + $0x38] sm:$0xff]
    %v30 = vld [vmem:[%s1 + $0x40] sm:$0xff]
    %v31 = vld [vmem:[%s1 + $0x48] sm:$0xff]
    %v32 = vld [vmem:[%s1 + $0x50] sm:$0xff]
    %v33 = vld [vmem:[%s1 + $0x58] sm:$0xff]
    %v34 = vld [vmem:[%s1 + $0x60] sm:$0xff]
    %v35 = vld [vmem:[%s1 + $0x68] sm:$0xff]
    %v36 = vld [vmem:[%s1 + $0x70] sm:$0xff]
    %v37 = vld [vmem:[%s1 + $0x78] sm:$0xff]
    %v38 = vld [vmem:[%s2] sm:$0x1]
    %v40 = vlaneseq
    %v41 = vshrl.u32 %v40, 7
    %v42 = vsub.s32 0, %v41
    %v43 = vrot.slane %v38, %v42
    %45 = vmatprep.subr.mxu0 0.0
    %46 = vmatpush1.msra.mxu0 %v22
    %47 = vmatprep.subr.mxu0 0.0
    %48 = vmatpush1.msra.mxu0 %v23
    %49 = vmatprep.subr.mxu0 0.0
    %50 = vmatpush1.msra.mxu0 %v24
    %51 = vmatprep.subr.mxu0 0.0
    %52 = vmatpush1.msra.mxu0 %v25
    %53 = vmatprep.subr.mxu0 0.0
    %54 = vmatpush1.msra.mxu0 %v26
    %55 = vmatprep.subr.mxu0 0.0
    %56 = vmatpush1.msra.mxu0 %v27
    %57 = vmatprep.subr.mxu0 0.0
    %58 = vmatpush1.msra.mxu0 %v28
    %59 = vmatprep.subr.mxu0 0.0
    %60 = vmatpush1.msra.mxu0 %v29
    %61 = vmatprep.subr.mxu0 0.0
    %62 = vmatpush1.msra.mxu0 %v30
    %63 = vmatprep.subr.mxu0 0.0
    %64 = vmatpush1.msra.mxu0 %v31
    %65 = vmatprep.subr.mxu0 0.0
    %66 = vmatpush1.msra.mxu0 %v32
    %67 = vmatprep.subr.mxu0 0.0
    %68 = vmatpush1.msra.mxu0 %v33
    %69 = vmatprep.subr.mxu0 0.0
    %70 = vmatpush1.msra.mxu0 %v34
    %71 = vmatprep.subr.mxu0 0.0
    %72 = vmatpush1.msra.mxu0 %v35
    %73 = vmatprep.subr.mxu0 0.0
    %74 = vmatpush1.msra.mxu0 %v36
    %75 = vmatprep.subr.mxu0 0.0
    %76 = vmatpush1.msra.mxu0 %v37
    %77 = vmatprep.subr.mxu0 0.0
    %78 = vmatpush1.msra.mxu0 0.0
    %79 = vmatprep.subr.mxu0 0.0
    %80 = vmatpush1.msra.mxu0 0.0
    %81 = vmatprep.subr.mxu0 0.0
    %82 = vmatpush1.msra.mxu0 0.0
    %83 = vmatprep.subr.mxu0 0.0
    %84 = vmatpush1.msra.mxu0 0.0
    %85 = vmatprep.subr.mxu0 0.0
    %86 = vmatpush1.msra.mxu0 0.0
    %87 = vmatprep.subr.mxu0 0.0
    %88 = vmatpush1.msra.mxu0 0.0
    %89 = vmatprep.subr.mxu0 0.0
    %90 = vmatpush1.msra.mxu0 0.0
    %91 = vmatprep.subr.mxu0 0.0
    %92 = vmatpush1.msra.mxu0 0.0
    %93 = vmatprep.subr.mxu0 0.0
    %94 = vmatpush1.msra.mxu0 0.0
    %95 = vmatprep.subr.mxu0 0.0
    %96 = vmatpush1.msra.mxu0 0.0
    %97 = vmatprep.subr.mxu0 0.0
    %98 = vmatpush1.msra.mxu0 0.0
    %99 = vmatprep.subr.mxu0 0.0
    %100 = vmatpush1.msra.mxu0 0.0
    %101 = vmatprep.subr.mxu0 0.0
    %102 = vmatpush1.msra.mxu0 0.0
    %103 = vmatprep.subr.mxu0 0.0
    %104 = vmatpush1.msra.mxu0 0.0
    %105 = vmatprep.subr.mxu0 0.0
    %106 = vmatpush1.msra.mxu0 0.0
    %107 = vmatprep.subr.mxu0 0.0
    %108 = vmatpush1.msra.mxu0 0.0
    %109 = vmatprep.mubr.f32.mxu0 0.0
    %110 = vmatmul.mubr.f32.gmra.mrb[0].mxu0 %v21
    %v111 = vpop.f32.mrb[0].mxu0
    %v112 = vadd.f32 %v43, %v111
    %v113 = vpop.f32.mrb[0].mxu0
    %114 = vdwg.mxu0
    %115 = vst [vmem:[#allocation2] sm:$0xf] %v112
    %v116 = vld [vmem:[#allocation2] ss:$2 sm:$0x3]
    %s117 = scalar_lea.vmem [#allocation2], 1
    %v118 = vld [vmem:[%s117] ss:$2 sm:$0x3]
    %v119 = vadd.f32 %v116, %v118
    %v120 = vld [vmem:[%s3] sm:$0xff]
    %v121 = vld [vmem:[%s3 + $0x8] sm:$0xff]
    %v122 = vld [vmem:[%s3 + $0x10] sm:$0xff]
    %v123 = vld [vmem:[%s3 + $0x18] sm:$0xff]
    %v124 = vld [vmem:[%s3 + $0x20] sm:$0xff]
    %v125 = vld [vmem:[%s3 + $0x28] sm:$0xff]
    %v126 = vld [vmem:[%s3 + $0x30] sm:$0xff]
    %v127 = vld [vmem:[%s3 + $0x38] sm:$0xff]
    %v128 = vld [vmem:[%s3 + $0x40] sm:$0xff]
    %v129 = vld [vmem:[%s3 + $0x48] sm:$0xff]
    %v130 = vld [vmem:[%s3 + $0x50] sm:$0xff]
    %v131 = vld [vmem:[%s3 + $0x58] sm:$0xff]
    %v132 = vld [vmem:[%s3 + $0x60] sm:$0xff]
    %v133 = vld [vmem:[%s3 + $0x68] sm:$0xff]
    %v134 = vld [vmem:[%s3 + $0x70] sm:$0xff]
    %v135 = vld [vmem:[%s3 + $0x78] sm:$0xff]
    %136 = vmatprep.subr.mxu0 0.0
    %137 = vmatpush1.msra.mxu0 %v120
    %138 = vmatprep.subr.mxu0 0.0
    %139 = vmatpush1.msra.mxu0 %v121
    %140 = vmatprep.subr.mxu0 0.0
    %141 = vmatpush1.msra.mxu0 %v122
    %142 = vmatprep.subr.mxu0 0.0
    %143 = vmatpush1.msra.mxu0 %v123
    %144 = vmatprep.subr.mxu0 0.0
    %145 = vmatpush1.msra.mxu0 %v124
    %146 = vmatprep.subr.mxu0 0.0
    %147 = vmatpush1.msra.mxu0 %v125
    %148 = vmatprep.subr.mxu0 0.0
    %149 = vmatpush1.msra.mxu0 %v126
    %150 = vmatprep.subr.mxu0 0.0
    %151 = vmatpush1.msra.mxu0 %v127
    %152 = vmatprep.subr.mxu0 0.0
    %153 = vmatpush1.msra.mxu0 %v128
    %154 = vmatprep.subr.mxu0 0.0
    %155 = vmatpush1.msra.mxu0 %v129
    %156 = vmatprep.subr.mxu0 0.0
    %157 = vmatpush1.msra.mxu0 %v130
    %158 = vmatprep.subr.mxu0 0.0
    %159 = vmatpush1.msra.mxu0 %v131
    %160 = vmatprep.subr.mxu0 0.0
    %161 = vmatpush1.msra.mxu0 %v132
    %162 = vmatprep.subr.mxu0 0.0
    %163 = vmatpush1.msra.mxu0 %v133
    %164 = vmatprep.subr.mxu0 0.0
    %165 = vmatpush1.msra.mxu0 %v134
    %166 = vmatprep.subr.mxu0 0.0
    %167 = vmatpush1.msra.mxu0 %v135
    %168 = vmatprep.subr.mxu0 0.0
    %169 = vmatpush1.msra.mxu0 0.0
    %170 = vmatprep.subr.mxu0 0.0
    %171 = vmatpush1.msra.mxu0 0.0
    %172 = vmatprep.subr.mxu0 0.0
    %173 = vmatpush1.msra.mxu0 0.0
    %174 = vmatprep.subr.mxu0 0.0
    %175 = vmatpush1.msra.mxu0 0.0
    %176 = vmatprep.subr.mxu0 0.0
    %177 = vmatpush1.msra.mxu0 0.0
    %178 = vmatprep.subr.mxu0 0.0
    %179 = vmatpush1.msra.mxu0 0.0
    %180 = vmatprep.subr.mxu0 0.0
    %181 = vmatpush1.msra.mxu0 0.0
    %182 = vmatprep.subr.mxu0 0.0
    %183 = vmatpush1.msra.mxu0 0.0
    %184 = vmatprep.subr.mxu0 0.0
    %185 = vmatpush1.msra.mxu0 0.0
    %186 = vmatprep.subr.mxu0 0.0
    %187 = vmatpush1.msra.mxu0 0.0
    %188 = vmatprep.subr.mxu0 0.0
    %189 = vmatpush1.msra.mxu0 0.0
    %190 = vmatprep.subr.mxu0 0.0
    %191 = vmatpush1.msra.mxu0 0.0
    %192 = vmatprep.subr.mxu0 0.0
    %193 = vmatpush1.msra.mxu0 0.0
    %194 = vmatprep.subr.mxu0 0.0
    %195 = vmatpush1.msra.mxu0 0.0
    %196 = vmatprep.subr.mxu0 0.0
    %197 = vmatpush1.msra.mxu0 0.0
    %198 = vmatprep.subr.mxu0 0.0
    %199 = vmatpush1.msra.mxu0 0.0
    %200 = vmatprep.mubr.f32.mxu0 0.0
    %201 = vmatmul.mubr.f32.gmra.mrb[0].mxu0 %v119
    %v202 = vpop.f32.mrb[0].mxu0
    %v203 = vadd.f32 0.0, %v202
    %v204 = vpop.f32.mrb[0].mxu0
    %205 = vdwg.mxu0
    %vm206 = vcmask 254976
    %207 = vst.msk [vmem:[#allocation4] sm:$0x3] %vm206, %v203
    // Predicated region
    $region18: #{tpu_custom_call.1} parent=1 // pred_check
      _
    $region19: #{tpu_custom_call.1} parent=1 // pred_check_branch
      %209 = sbr.rel (0) target = $region21
    $region20: #{tpu_custom_call.1} parent=1 // pred_region
      %s211 = ssub.s32 64, 64
      %212 = vsyncadd [#allocation3], %s211
      %s214 = sshll.u32 [#allocation2], 4
      %s215 = int_to_ptr.vmem [resolvable:$true] %s214
      %217 = dma.vmem_to_hbm [thread:$0]  %s215, 64, %s4, [#allocation3]
    $region21: #{tpu_custom_call.1} parent=1 // pred_fallthru
      _
    // Predicated region
    $region22: #{tpu_custom_call.1} parent=1 // pred_check
      _
    $region23: #{tpu_custom_call.1} parent=1 // pred_check_branch
      %219 = sbr.rel (0) target = $region25
    $region24: #{tpu_custom_call.1} parent=1 // pred_region
      %s221 = ssub.s32 32, 32
      %222 = vsyncadd [#allocation5], %s221
      %s224 = sshll.u32 [#allocation4], 4
      %s225 = int_to_ptr.vmem [resolvable:$true] %s224
      %227 = dma.vmem_to_hbm [thread:$0]  %s225, 32, %s5, [#allocation5]
    $region25: #{tpu_custom_call.1} parent=1 // pred_fallthru
      _
    // Predicated region
    $region26: #{tpu_custom_call.1} parent=1 // pred_check
      _
    $region27: #{tpu_custom_call.1} parent=1 // pred_check_branch
      %229 = sbr.rel (0) target = $region29
    $region28: #{tpu_custom_call.1} parent=1 // pred_region
      %230 = dma.done [#allocation3], 64
    $region29: #{tpu_custom_call.1} parent=1 // pred_fallthru
      _
    // Predicated region
    $region30: #{tpu_custom_call.1} parent=1 // pred_check
      _
    $region31: #{tpu_custom_call.1} parent=1 // pred_check_branch
      %232 = sbr.rel (0) target = $region33
    $region32: #{tpu_custom_call.1} parent=1 // pred_region
      %233 = dma.done [#allocation5], 32
    $region33: #{tpu_custom_call.1} parent=1 // pred_fallthru
      _
    %234 = vsyncpa [#allocation3], 1
    %235 = vsyncpa [#allocation5], 1

</llo_original>
